<compile_context>
chip_gen: v5e
topology: v5e:2x2
jax: 0.10.0
libtpu: 0.0.40
codegen_flags: <defaults>
</compile_context>

<pallas_src>
import functools

import jax
import jax.numpy as jnp
from jax.experimental import pallas as pl
from jax.experimental.pallas import tpu as pltpu


def _round_up(x, m):
    return ((x + m - 1) // m) * m


# ---------------------------------------------------------------------------
# Fused kernel:
#   xcat = [x_0 | x_1 | ... | x_{n-1}]                (assembled in VMEM scratch)
#   h    = relu( xcat @ W1' + b1' )                   (single K=D matmul, MXU)
#   out  = sigmoid( sum(h * w2_row, axis=-1) + b2 )   (VPU mul + lane reduce)
# ---------------------------------------------------------------------------
def _fused_head_kernel(*refs, n_inputs, compute_dtype):
    x_refs = refs[:n_inputs]
    w1_ref, b1_ref, w2_ref, b2_ref, o_ref, xcat_ref = refs[n_inputs:]

    # Assemble the concatenated feature tile in VMEM at static column offsets,
    # casting to the matmul dtype in-kernel (cheap VPU work, hidden under DMA).
    off = 0
    for x_ref in x_refs:
        d = x_ref.shape[-1]
        xcat_ref[:, off:off + d] = x_ref[...].astype(compute_dtype)
        off += d

    # Layer 1 (BatchNorm1 folded into W1'/b1'): one (TB, D) @ (D, H) MXU matmul.
    h = jnp.dot(xcat_ref[...], w1_ref[...], preferred_element_type=jnp.float32)
    h = jnp.maximum(h + b1_ref[...], 0.0)                           # (TB, H) f32

    # Layer 2 (BatchNorm2 folded into w2'/b2'): H -> 1 as a VPU multiply +
    # cross-lane reduce instead of an N=1 MXU matmul.  b2 comes from SMEM.
    logits = jnp.sum(h * w2_ref[...], axis=-1, keepdims=True) + b2_ref[0, 0]
    o_ref[...] = jax.nn.sigmoid(logits).astype(o_ref.dtype)


# ---------------------------------------------------------------------------
# Wrapper: one pallas_call for the entire Avitor head.
# ---------------------------------------------------------------------------
def avitor_head_forward(features, folded, *, tile_b=1024, compute_dtype=jnp.float32):
    n = len(features)
    B = features[0].shape[0]
    dims = [int(x.shape[1]) for x in features]
    D = sum(dims)
    H = folded["b1"].shape[-1]
    assert folded["w1"].shape == (D, H)

    # ---- batch tile selection (mem/overhead-bound kernel: big tiles) ----
    b8 = _round_up(B, 8)
    TB = min(_round_up(tile_b, 8), b8)        # shrink only if the batch is small
    # Keep >= 2 grid steps when the batch is large enough, so the "parallel"
    # grid axis can actually shard across v7x's two TensorCores.
    if TB == b8 and b8 >= 512:
        TB = _round_up((b8 + 1) // 2, 8)
    B_pad = _round_up(B, TB)

    # Features are passed in their native dtype (NO wrapper-side cast: that would
    # be an extra un-fused HBM pass).  Only pad the batch if needed.
    feats = list(features)
    if B_pad != B:
        feats = [jnp.pad(x, ((0, B_pad - B), (0, 0))) for x in feats]

    # Folded weights are tiny; casting them in the wrapper is fine.
    w1 = folded["w1"].astype(compute_dtype)                # (D, H), VMEM-resident
    b1 = folded["b1"].reshape(1, H).astype(jnp.float32)    # (1, H)
    w2 = folded["w2_row"].reshape(1, H).astype(jnp.float32)  # (1, H) row for VPU reduce
    b2 = folded["b2"].reshape(1, 1).astype(jnp.float32)    # scalar via SMEM

    in_specs = (
        [pl.BlockSpec((TB, d), lambda i: (i, 0)) for d in dims]       # batch-tiled
        + [pl.BlockSpec((D, H), lambda i: (0, 0)),                    # resident W1'
           pl.BlockSpec((1, H), lambda i: (0, 0)),                    # resident b1'
           pl.BlockSpec((1, H), lambda i: (0, 0)),                    # resident w2' row
           pl.BlockSpec(memory_space=pltpu.MemorySpace.SMEM)]         # b2 scalar
    )
    out_spec = pl.BlockSpec((TB, 1), lambda i: (i, 0))

    kernel = functools.partial(_fused_head_kernel, n_inputs=n,
                               compute_dtype=compute_dtype)
    out = pl.pallas_call(
        kernel,
        out_shape=jax.ShapeDtypeStruct((B_pad, 1), jnp.float32),
        grid=(pl.cdiv(B_pad, TB),),
        in_specs=in_specs,
        out_specs=out_spec,
        scratch_shapes=[pltpu.VMEM((TB, D), compute_dtype)],          # xcat tile
        compiler_params=pltpu.CompilerParams(
            dimension_semantics=("parallel",)),
    )(*feats, w1, b1, w2, b2)
    return out[:B]


# ---------------------------------------------------------------------------
# Parameters: raw (mirrors Avitor.fc) and the BN-folded form used by the kernel.
# ---------------------------------------------------------------------------
def make_params(key, in_features, hidden=50, out=1):
    k = jax.random.split(key, 8)
    # BatchNorm1d(in_features). PyTorch init is weight=1, bias=0, running stats 0/1;
    # nontrivial deterministic values are used here to exercise the folded path.
    bn1_gamma = 1.0 + 0.1 * jax.random.normal(k[0], (in_features,), jnp.float32)
    bn1_beta = 0.1 * jax.random.normal(k[1], (in_features,), jnp.float32)
    bn1_mean = 0.05 * jax.random.normal(k[2], (in_features,), jnp.float32)
    bn1_var = 1.0 + 0.1 * jax.random.uniform(k[3], (in_features,), jnp.float32)
    # Linear(in_features, hidden): xavier_normal_ weight, stored (in, out).
    std1 = (2.0 / (in_features + hidden)) ** 0.5
    w1 = std1 * jax.random.normal(k[4], (in_features, hidden), jnp.float32)
    b1 = jnp.zeros((hidden,), jnp.float32)
    # BatchNorm1d(hidden)
    bn2_gamma = 1.0 + 0.1 * jax.random.normal(k[5], (hidden,), jnp.float32)
    bn2_beta = 0.1 * jax.random.normal(k[6], (hidden,), jnp.float32)
    bn2_mean = jnp.zeros((hidden,), jnp.float32)
    bn2_var = jnp.ones((hidden,), jnp.float32)
    # Linear(hidden, 1): xavier_normal_ weight.
    std2 = (2.0 / (hidden + out)) ** 0.5
    w2 = std2 * jax.random.normal(k[7], (hidden, out), jnp.float32)
    b2 = jnp.zeros((out,), jnp.float32)
    return dict(bn1_gamma=bn1_gamma, bn1_beta=bn1_beta, bn1_mean=bn1_mean, bn1_var=bn1_var,
                w1=w1, b1=b1,
                bn2_gamma=bn2_gamma, bn2_beta=bn2_beta, bn2_mean=bn2_mean, bn2_var=bn2_var,
                w2=w2, b2=b2)


def fold_params(raw, eps=1e-5):
    """Fold eval-mode BatchNorm into the Linear weights/biases (done once, outside the kernel)."""
    a1 = raw["bn1_gamma"] / jnp.sqrt(raw["bn1_var"] + eps)
    c1 = raw["bn1_beta"] - raw["bn1_mean"] * a1
    w1f = a1[:, None] * raw["w1"]                    # (D, H)
    b1f = c1 @ raw["w1"] + raw["b1"]                 # (H,)

    a2 = raw["bn2_gamma"] / jnp.sqrt(raw["bn2_var"] + eps)
    c2 = raw["bn2_beta"] - raw["bn2_mean"] * a2
    w2f = a2[:, None] * raw["w2"]                    # (H, 1)
    b2f = c2 @ raw["w2"] + raw["b2"]                 # (1,)

    return dict(w1=w1f, b1=b1f.reshape(1, -1),
                w2_row=w2f.reshape(1, -1), b2=b2f.reshape(1, 1))


def reference_forward(features, raw, eps=1e-5):
    """Pure-JAX reference with the original (unfolded) op order."""
    z = jnp.concatenate(features, axis=1)
    zn = (z - raw["bn1_mean"]) / jnp.sqrt(raw["bn1_var"] + eps) * raw["bn1_gamma"] + raw["bn1_beta"]
    h = jnp.maximum(zn @ raw["w1"] + raw["b1"], 0.0)
    hn = (h - raw["bn2_mean"]) / jnp.sqrt(raw["bn2_var"] + eps) * raw["bn2_gamma"] + raw["bn2_beta"]
    return jax.nn.sigmoid(hn @ raw["w2"] + raw["b2"])


if __name__ == "__main__":
    key = jax.random.PRNGKey(0)

    # Submodel output widths: out_num, out_cat[0], out_cat[1], out_txt, out_word[0].
    feature_dims = [32, 8, 16, 128, 24]          # in_features = 208
    hidden = 50
    batch = 16

    key, kp = jax.random.split(key)
    raw = make_params(kp, sum(feature_dims), hidden=hidden)
    folded = fold_params(raw)

    feats = []
    for d in feature_dims:
        key, kx = jax.random.split(key)
        feats.append(jax.random.normal(kx, (batch, d), jnp.float32))

    ref = reference_forward(feats, raw)

    # Default (large-tile) configuration; for this small demo batch TB collapses to 16.
    out = avitor_head_forward(feats, folded)
    out = jax.block_until_ready(out)
    assert out.shape == (batch, 1), out.shape
    assert bool(jnp.all(jnp.isfinite(out)))
    assert bool(jnp.all((out > 0.0) & (out < 1.0)))          # sigmoid output
    assert bool(jnp.allclose(out, ref, rtol=1e-5, atol=1e-5)), \
        float(jnp.max(jnp.abs(out - ref)))

    # Small tile so the batch grid actually has >1 step (exercises the pipeline).
    out_multi = avitor_head_forward(feats, folded, tile_b=8)
    out_multi = jax.block_until_ready(out_multi)
    assert bool(jnp.allclose(out_multi, ref, rtol=1e-5, atol=1e-5)), \
        float(jnp.max(jnp.abs(out_multi - ref)))

    # Optional bf16 matmul path (in-kernel cast only; features stay f32 in HBM).
    out_bf16 = avitor_head_forward(feats, folded, compute_dtype=jnp.bfloat16)
    out_bf16 = jax.block_until_ready(out_bf16)
    assert bool(jnp.allclose(out_bf16, ref, atol=5e-2)), \
        float(jnp.max(jnp.abs(out_bf16 - ref)))

    print("KERNEL_OK")
</pallas_src>

<mosaic_0001>
module attributes {stable_mosaic.version = 11 : i64} {
  func.func @_fused_head_kernel(%arg0: i32, %arg1: memref<16x32xf32, #tpu.memory_space<vmem>>, %arg2: memref<16x8xf32, #tpu.memory_space<vmem>>, %arg3: memref<16x16xf32, #tpu.memory_space<vmem>>, %arg4: memref<16x128xf32, #tpu.memory_space<vmem>>, %arg5: memref<16x24xf32, #tpu.memory_space<vmem>>, %arg6: memref<208x50xf32, #tpu.memory_space<vmem>>, %arg7: memref<1x50xf32, #tpu.memory_space<vmem>>, %arg8: memref<1x50xf32, #tpu.memory_space<vmem>>, %arg9: memref<1x1xf32, #tpu.memory_space<smem>>, %arg10: memref<16x1xf32, #tpu.memory_space<vmem>>, %arg11: memref<16x208xf32, #tpu.memory_space<vmem>>) attributes {dimension_semantics = [#tpu.dimension_semantics<parallel>], iteration_bounds = array<i64: 1>, scalar_prefetch = 0 : i64, scratch_operands = 1 : i64, tpu.core_type = #tpu.core_type<tc>, window_params = [{transform_indices = @transform_0, window_bounds = array<i64: 16, 32>}, {transform_indices = @transform_1, window_bounds = array<i64: 16, 8>}, {transform_indices = @transform_2, window_bounds = array<i64: 16, 16>}, {transform_indices = @transform_3, window_bounds = array<i64: 16, 128>}, {transform_indices = @transform_4, window_bounds = array<i64: 16, 24>}, {pipeline_mode = #tpu.pipeline_mode<synchronous>, transform_indices = @transform_5, window_bounds = array<i64: 208, 50>}, {pipeline_mode = #tpu.pipeline_mode<synchronous>, transform_indices = @transform_6, window_bounds = array<i64: 1, 50>}, {pipeline_mode = #tpu.pipeline_mode<synchronous>, transform_indices = @transform_7, window_bounds = array<i64: 1, 50>}, {transform_indices = @transform_8, window_bounds = array<i64: 1, 1>}, {transform_indices = @transform_9, window_bounds = array<i64: 16, 1>}]} {
    %c0 = arith.constant 0 : index
    %c0_0 = arith.constant 0 : index
    %0 = vector.load %arg1[%c0, %c0_0] : memref<16x32xf32, #tpu.memory_space<vmem>>, vector<16x32xf32>
    %c0_1 = arith.constant 0 : index
    %c0_2 = arith.constant 0 : index
    %1 = vector.load %arg11[%c0_1, %c0_2] : memref<16x208xf32, #tpu.memory_space<vmem>>, vector<16x32xf32>
    tpu.vector_store %arg11[%c0_1, %c0_2], %0 {strides = array<i32>} : memref<16x208xf32, #tpu.memory_space<vmem>>, vector<16x32xf32>,
    %c0_3 = arith.constant 0 : index
    %c0_4 = arith.constant 0 : index
    %2 = vector.load %arg2[%c0_3, %c0_4] : memref<16x8xf32, #tpu.memory_space<vmem>>, vector<16x8xf32>
    %c0_5 = arith.constant 0 : index
    %c32 = arith.constant 32 : index
    %3 = vector.load %arg11[%c0_5, %c32] : memref<16x208xf32, #tpu.memory_space<vmem>>, vector<16x8xf32>
    tpu.vector_store %arg11[%c0_5, %c32], %2 {strides = array<i32>} : memref<16x208xf32, #tpu.memory_space<vmem>>, vector<16x8xf32>,
    %c0_6 = arith.constant 0 : index
    %c0_7 = arith.constant 0 : index
    %4 = vector.load %arg3[%c0_6, %c0_7] : memref<16x16xf32, #tpu.memory_space<vmem>>, vector<16x16xf32>
    %c0_8 = arith.constant 0 : index
    %c40 = arith.constant 40 : index
    %5 = vector.load %arg11[%c0_8, %c40] : memref<16x208xf32, #tpu.memory_space<vmem>>, vector<16x16xf32>
    tpu.vector_store %arg11[%c0_8, %c40], %4 {strides = array<i32>} : memref<16x208xf32, #tpu.memory_space<vmem>>, vector<16x16xf32>,
    %c0_9 = arith.constant 0 : index
    %c0_10 = arith.constant 0 : index
    %6 = vector.load %arg4[%c0_9, %c0_10] : memref<16x128xf32, #tpu.memory_space<vmem>>, vector<16x128xf32>
    %c0_11 = arith.constant 0 : index
    %c56 = arith.constant 56 : index
    %7 = vector.load %arg11[%c0_11, %c56] : memref<16x208xf32, #tpu.memory_space<vmem>>, vector<16x128xf32>
    tpu.vector_store %arg11[%c0_11, %c56], %6 {strides = array<i32>} : memref<16x208xf32, #tpu.memory_space<vmem>>, vector<16x128xf32>,
    %c0_12 = arith.constant 0 : index
    %c0_13 = arith.constant 0 : index
    %8 = vector.load %arg5[%c0_12, %c0_13] : memref<16x24xf32, #tpu.memory_space<vmem>>, vector<16x24xf32>
    %c0_14 = arith.constant 0 : index
    %c184 = arith.constant 184 : index
    %9 = vector.load %arg11[%c0_14, %c184] : memref<16x208xf32, #tpu.memory_space<vmem>>, vector<16x24xf32>
    tpu.vector_store %arg11[%c0_14, %c184], %8 {strides = array<i32>} : memref<16x208xf32, #tpu.memory_space<vmem>>, vector<16x24xf32>,
    %c0_15 = arith.constant 0 : index
    %c0_16 = arith.constant 0 : index
    %10 = vector.load %arg11[%c0_15, %c0_16] : memref<16x208xf32, #tpu.memory_space<vmem>>, vector<16x208xf32>
    %c0_17 = arith.constant 0 : index
    %c0_18 = arith.constant 0 : index
    %11 = vector.load %arg6[%c0_17, %c0_18] : memref<208x50xf32, #tpu.memory_space<vmem>>, vector<208x50xf32>
    %cst = arith.constant dense<0.000000e+00> : vector<16x50xf32>
    %12 = tpu.matmul %10, %11, %cst {dimension_numbers = #tpu.dot_dimension_numbers<[1], [0], [0], [1], [0, 0, 1, 1], [], []>} : vector<16x208xf32>, vector<208x50xf32>, vector<16x50xf32> -> vector<16x50xf32>
    %c0_19 = arith.constant 0 : index
    %c0_20 = arith.constant 0 : index
    %13 = vector.load %arg7[%c0_19, %c0_20] : memref<1x50xf32, #tpu.memory_space<vmem>>, vector<1x50xf32>
    %14 = vector.broadcast %13 : vector<1x50xf32> to vector<16x50xf32>
    %15 = arith.addf %12, %14 : vector<16x50xf32>
    %cst_21 = arith.constant 0.000000e+00 : f32
    %16 = vector.broadcast %cst_21 : f32 to vector<16x50xf32>
    %17 = arith.maximumf %15, %16 : vector<16x50xf32>
    %c0_22 = arith.constant 0 : index
    %c0_23 = arith.constant 0 : index
    %18 = vector.load %arg8[%c0_22, %c0_23] : memref<1x50xf32, #tpu.memory_space<vmem>>, vector<1x50xf32>
    %19 = vector.broadcast %18 : vector<1x50xf32> to vector<16x50xf32>
    %20 = arith.mulf %17, %19 : vector<16x50xf32>
    %cst_24 = arith.constant dense<0.000000e+00> : vector<16xf32>
    %21 = vector.multi_reduction <add>, %20, %cst_24 [1] : vector<16x50xf32> to vector<16xf32>
    %22 = vector.shape_cast %21 : vector<16xf32> to vector<16x1xf32>
    %c0_25 = arith.constant 0 : index
    %c0_26 = arith.constant 0 : index
    %23 = memref.load %arg9[%c0_25, %c0_26] : memref<1x1xf32, #tpu.memory_space<smem>>
    %24 = vector.broadcast %23 : f32 to vector<16x1xf32>
    %25 = arith.addf %22, %24 : vector<16x1xf32>
    %26 = arith.negf %25 : vector<16x1xf32>
    %27 = math.exp %26 : vector<16x1xf32>
    %cst_27 = arith.constant 1.000000e+00 : f32
    %28 = vector.broadcast %cst_27 : f32 to vector<16x1xf32>
    %29 = arith.addf %28, %27 : vector<16x1xf32>
    %30 = arith.divf %28, %29 : vector<16x1xf32>
    %c0_28 = arith.constant 0 : index
    %c0_29 = arith.constant 0 : index
    %31 = vector.load %arg10[%c0_28, %c0_29] : memref<16x1xf32, #tpu.memory_space<vmem>>, vector<16x1xf32>
    tpu.vector_store %arg10[%c0_28, %c0_29], %30 {strides = array<i32>} : memref<16x1xf32, #tpu.memory_space<vmem>>, vector<16x1xf32>,
    return
  }
  func.func @transform_0(%arg0: i32) -> (i32, i32) {
    %c0_i32 = arith.constant 0 : i32
    %c0_i32_0 = arith.constant 0 : i32
    return %arg0, %c0_i32 : i32, i32
  }
  func.func @transform_1(%arg0: i32) -> (i32, i32) {
    %c0_i32 = arith.constant 0 : i32
    %c0_i32_0 = arith.constant 0 : i32
    return %arg0, %c0_i32 : i32, i32
  }
  func.func @transform_2(%arg0: i32) -> (i32, i32) {
    %c0_i32 = arith.constant 0 : i32
    %c0_i32_0 = arith.constant 0 : i32
    return %arg0, %c0_i32 : i32, i32
  }
  func.func @transform_3(%arg0: i32) -> (i32, i32) {
    %c0_i32 = arith.constant 0 : i32
    %c0_i32_0 = arith.constant 0 : i32
    return %arg0, %c0_i32 : i32, i32
  }
  func.func @transform_4(%arg0: i32) -> (i32, i32) {
    %c0_i32 = arith.constant 0 : i32
    %c0_i32_0 = arith.constant 0 : i32
    return %arg0, %c0_i32 : i32, i32
  }
  func.func @transform_5(%arg0: i32) -> (i32, i32) {
    %c0_i32 = arith.constant 0 : i32
    %c0_i32_0 = arith.constant 0 : i32
    %c0_i32_1 = arith.constant 0 : i32
    return %c0_i32, %c0_i32_0 : i32, i32
  }
  func.func @transform_6(%arg0: i32) -> (i32, i32) {
    %c0_i32 = arith.constant 0 : i32
    %c0_i32_0 = arith.constant 0 : i32
    %c0_i32_1 = arith.constant 0 : i32
    return %c0_i32, %c0_i32_0 : i32, i32
  }
  func.func @transform_7(%arg0: i32) -> (i32, i32) {
    %c0_i32 = arith.constant 0 : i32
    %c0_i32_0 = arith.constant 0 : i32
    %c0_i32_1 = arith.constant 0 : i32
    return %c0_i32, %c0_i32_0 : i32, i32
  }
  func.func @transform_8(%arg0: i32) -> (i32, i32) {
    %c0_i32 = arith.constant 0 : i32
    %c0_i32_0 = arith.constant 0 : i32
    %c0_i32_1 = arith.constant 0 : i32
    return %c0_i32, %c0_i32_0 : i32, i32
  }
  func.func @transform_9(%arg0: i32) -> (i32, i32) {
    %c0_i32 = arith.constant 0 : i32
    %c0_i32_0 = arith.constant 0 : i32
    return %arg0, %c0_i32 : i32, i32
  }
}

</mosaic_0001>

<llo_original>
// kernel: tpu_custom_call.1
$region0: #{tpu_custom_call.1}
  #allocation0 [shape = 'u32[]', space=smem, size = 0x4, offset = 0x4, fixed_abs, tag = 'smem constant byte address 0x4 - core index']
  #allocation1 [shape = 'u32[72,128]{1,0:T(1,128)}', space=vmem, size = 0x9000, scoped, tag = 'internal scratch']
  #allocation2 [shape = 'f32[16,208]{1,0:T(8,128)}', space=vmem, size = 0x4000, scoped, tag = 'scratch operand']
  #allocation3 [shape = 'f32[1,1]{1,0:T(1,128)S(6)}', space=smem, size = 0x200, scoped, tag = 'scoped memory for tpu_custom_call.1']
  %s0 = inlined_call_operand.vmem [shape: f32[16,32], index: 0, kind: input, shape index: {}]
  %s1 = inlined_call_operand.vmem [shape: f32[16,8], index: 1, kind: input, shape index: {}]
  %s2 = inlined_call_operand.vmem [shape: f32[16,16], index: 2, kind: input, shape index: {}]
  %s3 = inlined_call_operand.vmem [shape: f32[16,128], index: 3, kind: input, shape index: {}]
  %s4 = inlined_call_operand.vmem [shape: f32[16,24], index: 4, kind: input, shape index: {}]
  %s5 = inlined_call_operand.vmem [shape: f32[208,50], index: 5, kind: input, shape index: {}]
  %s6 = inlined_call_operand.vmem [shape: f32[1,50], index: 6, kind: input, shape index: {}]
  %s7 = inlined_call_operand.vmem [shape: f32[1,50], index: 7, kind: input, shape index: {}]
  %s8 = inlined_call_operand.<no memory space> [shape: f32[1,1], index: 8, kind: input, shape index: {}]
  %s9 = inlined_call_operand.vmem [shape: f32[16,1], index: 9, kind: output, shape index: {}]
  %s10 = sld [smem:[#allocation0]]
  $region46: #{tpu_custom_call.1} parent=0
    _
  %s12 = ssub.s32 1, %s10
  %s13 = scalar_select 0, %s12, %s10
  %14 = sst [smem:[#allocation3]] %s8
  // Predicated region
  $region2: #{tpu_custom_call.1} parent=0 // pred_check
    _
  $region3: #{tpu_custom_call.1} parent=0 // pred_check_branch
    %16 = sbr.rel (0) target = $region5
  $region4: #{tpu_custom_call.1} parent=0 // pred_region
    _
  $region5: #{tpu_custom_call.1} parent=0 // pred_fallthru
    _
  // Predicated region
  $region6: #{tpu_custom_call.1} parent=0 // pred_check
    _
  $region7: #{tpu_custom_call.1} parent=0 // pred_check_branch
    %18 = sbr.rel (0) target = $region9
  $region8: #{tpu_custom_call.1} parent=0 // pred_region
    _
  $region9: #{tpu_custom_call.1} parent=0 // pred_fallthru
    _
  // Predicated region
  $region10: #{tpu_custom_call.1} parent=0 // pred_check
    _
  $region11: #{tpu_custom_call.1} parent=0 // pred_check_branch
    %20 = sbr.rel (0) target = $region13
  $region12: #{tpu_custom_call.1} parent=0 // pred_region
    _
  $region13: #{tpu_custom_call.1} parent=0 // pred_fallthru
    _
  // Predicated region
  $region14: #{tpu_custom_call.1} parent=0 // pred_check
    _
  $region15: #{tpu_custom_call.1} parent=0 // pred_check_branch
    %22 = sbr.rel (0) target = $region17
  $region16: #{tpu_custom_call.1} parent=0 // pred_region
    _
  $region17: #{tpu_custom_call.1} parent=0 // pred_fallthru
    _
  // Predicated region
  $region18: #{tpu_custom_call.1} parent=0 // pred_check
    _
  $region19: #{tpu_custom_call.1} parent=0 // pred_check_branch
    %24 = sbr.rel (0) target = $region21
  $region20: #{tpu_custom_call.1} parent=0 // pred_region
    _
  $region21: #{tpu_custom_call.1} parent=0 // pred_fallthru
    _
  // Predicated region
  $region22: #{tpu_custom_call.1} parent=0 // pred_check
    _
  $region23: #{tpu_custom_call.1} parent=0 // pred_check_branch
    %26 = sbr.rel (0) target = $region25
  $region24: #{tpu_custom_call.1} parent=0 // pred_region
    _
  $region25: #{tpu_custom_call.1} parent=0 // pred_fallthru
    _
  // Predicated region
  $region26: #{tpu_custom_call.1} parent=0 // pred_check
    _
  $region27: #{tpu_custom_call.1} parent=0 // pred_check_branch
    %28 = sbr.rel (0) target = $region29
  $region28: #{tpu_custom_call.1} parent=0 // pred_region
    _
  $region29: #{tpu_custom_call.1} parent=0 // pred_fallthru
    _
  // Predicated region
  $region30: #{tpu_custom_call.1} parent=0 // pred_check
    _
  $region31: #{tpu_custom_call.1} parent=0 // pred_check_branch
    %30 = sbr.rel (0) target = $region33
  $region32: #{tpu_custom_call.1} parent=0 // pred_region
    _
  $region33: #{tpu_custom_call.1} parent=0 // pred_fallthru
    _
  // Predicated region
  $region34: #{tpu_custom_call.1} parent=0 // pred_check
    _
  $region35: #{tpu_custom_call.1} parent=0 // pred_check_branch
    %32 = sbr.rel (0) target = $region37
  $region36: #{tpu_custom_call.1} parent=0 // pred_region
    _
  $region37: #{tpu_custom_call.1} parent=0 // pred_fallthru
    _
  %v33 = vld [vmem:[%s0] sm:$0xff]
  %v34 = vld [vmem:[%s0 + $0x8] sm:$0xff]
  %vm35 = vcmask 261120
  %36 = vst.msk [vmem:[#allocation2] sm:$0xff] %vm35, %v33
  %37 = vst.msk [vmem:[#allocation2 + $0x10] sm:$0xff] %vm35, %v34
  %v38 = vld [vmem:[%s1] sm:$0xff]
  %v39 = vld [vmem:[%s1 + $0x8] sm:$0xff]
  %42 = vrot.lane.b32.xlu0 %v38, 32
  %v43 = vpop.permute.xlu0 %42
  %44 = vrot.lane.b32.xlu0 %v39, 32
  %v45 = vpop.permute.xlu0 %44
  %vm48 = vcmask 326912
  %49 = vst.msk [vmem:[#allocation2] sm:$0xff] %vm48, %v43
  %50 = vst.msk [vmem:[#allocation2 + $0x10] sm:$0xff] %vm48, %v45
  %v51 = vld [vmem:[%s2] sm:$0xff]
  %v52 = vld [vmem:[%s2 + $0x8] sm:$0xff]
  %55 = vrot.lane.b32.xlu0 %v51, 40
  %v56 = vpop.permute.xlu0 %55
  %57 = vrot.lane.b32.xlu0 %v52, 40
  %v58 = vpop.permute.xlu0 %57
  %vm61 = vcmask 458048
  %62 = vst.msk [vmem:[#allocation2] sm:$0xff] %vm61, %v56
  %63 = vst.msk [vmem:[#allocation2 + $0x10] sm:$0xff] %vm61, %v58
  %v64 = vld [vmem:[%s3] sm:$0xff]
  %v65 = vld [vmem:[%s3 + $0x8] sm:$0xff]
  %68 = vrot.lane.b32.xlu0 %v64, 56
  %v69 = vpop.permute.xlu0 %68
  %70 = vrot.lane.b32.xlu0 %v65, 56
  %v71 = vpop.permute.xlu0 %70
  %vm74 = vcmask 1048000
  %75 = vst.msk [vmem:[#allocation2] sm:$0xff] %vm74, %v69
  %vm76 = vcmask 457728
  %77 = vst.msk [vmem:[#allocation2 + $0x8] sm:$0xff] %vm76, %v69
  %78 = vst.msk [vmem:[#allocation2 + $0x10] sm:$0xff] %vm74, %v71
  %79 = vst.msk [vmem:[#allocation2 + $0x18] sm:$0xff] %vm76, %v71
  %v80 = vld [vmem:[%s4] sm:$0xff]
  %v81 = vld [vmem:[%s4 + $0x8] sm:$0xff]
  %84 = vrot.lane.b32.xlu0 %v80, 56
  %v85 = vpop.permute.xlu0 %84
  %86 = vrot.lane.b32.xlu0 %v81, 56
  %v87 = vpop.permute.xlu0 %86
  %vm90 = vcmask 654784
  %91 = vst.msk [vmem:[#allocation2 + $0x8] sm:$0xff] %vm90, %v85
  %92 = vst.msk [vmem:[#allocation2 + $0x18] sm:$0xff] %vm90, %v87
  %v93 = vld [vmem:[#allocation2] sm:$0xff]
  %v94 = vld [vmem:[#allocation2 + $0x8] sm:$0xff]
  %v95 = vld [vmem:[#allocation2 + $0x10] sm:$0xff]
  %v96 = vld [vmem:[#allocation2 + $0x18] sm:$0xff]
  %v97 = vld [vmem:[%s5] sm:$0xff]
  %v98 = vld [vmem:[%s5 + $0x8] sm:$0xff]
  %v99 = vld [vmem:[%s5 + $0x10] sm:$0xff]
  %v100 = vld [vmem:[%s5 + $0x18] sm:$0xff]
  %v101 = vld [vmem:[%s5 + $0x20] sm:$0xff]
  %v102 = vld [vmem:[%s5 + $0x28] sm:$0xff]
  %v103 = vld [vmem:[%s5 + $0x30] sm:$0xff]
  %v104 = vld [vmem:[%s5 + $0x38] sm:$0xff]
  %v105 = vld [vmem:[%s5 + $0x40] sm:$0xff]
  %v106 = vld [vmem:[%s5 + $0x48] sm:$0xff]
  %v107 = vld [vmem:[%s5 + $0x50] sm:$0xff]
  %v108 = vld [vmem:[%s5 + $0x58] sm:$0xff]
  %v109 = vld [vmem:[%s5 + $0x60] sm:$0xff]
  %v110 = vld [vmem:[%s5 + $0x68] sm:$0xff]
  %v111 = vld [vmem:[%s5 + $0x70] sm:$0xff]
  %v112 = vld [vmem:[%s5 + $0x78] sm:$0xff]
  %v113 = vld [vmem:[%s5 + $0x80] sm:$0xff]
  %v114 = vld [vmem:[%s5 + $0x88] sm:$0xff]
  %v115 = vld [vmem:[%s5 + $0x90] sm:$0xff]
  %v116 = vld [vmem:[%s5 + $0x98] sm:$0xff]
  %v117 = vld [vmem:[%s5 + $0xa0] sm:$0xff]
  %v118 = vld [vmem:[%s5 + $0xa8] sm:$0xff]
  %v119 = vld [vmem:[%s5 + $0xb0] sm:$0xff]
  %v120 = vld [vmem:[%s5 + $0xb8] sm:$0xff]
  %v121 = vld [vmem:[%s5 + $0xc0] sm:$0xff]
  %v122 = vld [vmem:[%s5 + $0xc8] sm:$0xff]
  %v123 = vld [vmem:[%s6] sm:$0x1]
  %v125 = vperm.slane %v123, 0
  %vm127 = vcmask 654336
  %v129 = vsel %vm127, %v94, 0
  %v132 = vsel %vm127, %v96, 0
  %134 = vmatpush.msra.mxu0 %v112
  %135 = vmatpush.msra.mxu0 %v111
  %136 = vmatpush.msra.mxu0 %v110
  %137 = vmatpush.msra.mxu0 %v109
  %138 = vmatpush.msra.mxu0 %v108
  %139 = vmatpush.msra.mxu0 %v107
  %140 = vmatpush.msra.mxu0 %v106
  %141 = vmatpush.msra.mxu0 %v105
  %142 = vmatpush.msra.mxu0 %v104
  %143 = vmatpush.msra.mxu0 %v103
  %144 = vmatpush.msra.mxu0 %v102
  %145 = vmatpush.msra.mxu0 %v101
  %146 = vmatpush.msra.mxu0 %v100
  %147 = vmatpush.msra.mxu0 %v99
  %148 = vmatpush.msra.mxu0 %v98
  %149 = vmatpush.msra.mxu0 %v97
  %150 = vmatmul.f32.gmra.mxu0 %v93
  %v151 = vpop.f32.mrf.mxu0
  %v152 = vadd.f32 %v125, %v151
  %153 = vmatmul.f32.gmra.mxu0 %v95
  %v154 = vpop.f32.mrf.mxu0
  %v155 = vadd.f32 %v125, %v154
  %156 = vdwg.mxu0
  %157 = vmatpush.msra.mxu0 0.0
  %158 = vmatpush.msra.mxu0 0.0
  %159 = vmatpush.msra.mxu0 0.0
  %160 = vmatpush.msra.mxu0 0.0
  %161 = vmatpush.msra.mxu0 0.0
  %162 = vmatpush.msra.mxu0 0.0
  %163 = vmatpush.msra.mxu0 %v122
  %164 = vmatpush.msra.mxu0 %v121
  %165 = vmatpush.msra.mxu0 %v120
  %166 = vmatpush.msra.mxu0 %v119
  %167 = vmatpush.msra.mxu0 %v118
  %168 = vmatpush.msra.mxu0 %v117
  %169 = vmatpush.msra.mxu0 %v116
  %170 = vmatpush.msra.mxu0 %v115
  %171 = vmatpush.msra.mxu0 %v114
  %172 = vmatpush.msra.mxu0 %v113
  %173 = vmatmul.f32.gmra.mxu0 %v129
  %v174 = vpop.f32.mrf.mxu0
  %v175 = vadd.f32 %v152, %v174
  %176 = vmatmul.f32.gmra.mxu0 %v132
  %v177 = vpop.f32.mrf.mxu0
  %v178 = vadd.f32 %v155, %v177
  %179 = vdwg.mxu0
  %v180 = vmax.f32 %v175, 0.0
  %v181 = vmax.f32 %v178, 0.0
  %v182 = vld [vmem:[%s7] sm:$0x1]
  %v184 = vperm.slane %v182, 0
  %v186 = vmul.f32 %v180, %v184
  %v187 = vmul.f32 %v181, %v184
  %vm188 = vcmask 408576
  %v189 = vsel %vm188, %v186, 0.0
  %190 = vadd.xlane.f32.xlu0 %v189
  %v191 = vpop.xlane.xlu0 %190
  %v192 = vsel %vm188, %v187, 0.0
  %193 = vadd.xlane.f32.xlu0 %v192
  %v194 = vpop.xlane.xlu0 %193
  %s195 = sld [smem:[#allocation3]]
  %v196 = vstv %s195
  %v197 = vadd.f32 %v191, %v196
  %v198 = vadd.f32 %v194, %v196
  %v199 = vxor.u32 %v197, 2147483648
  %v200 = vxor.u32 %v198, 2147483648
  %v201 = vmul.f32 %v199, 1.442695
  %v202 = vpow.pop %v201
  %v203 = vmul.f32 %v200, 1.442695
  %v204 = vpow.pop %v203
  %v205 = vadd.f32 %v202, 1.0
  %v206 = vadd.f32 %v204, 1.0
  %v207 = vrcp.pop %v205
  %v208 = vmul.f32 %v205, %v207
  %v209 = vsub.f32 1.0, %v208
  %v210 = vmul.f32 %v207, %v209
  %v211 = vadd.f32 %v207, %v210
  %vm212 = vweird.f32 %v205
  %vm213 = vweird.f32 %v207
  %vm214 = vmor %vm212, %vm213
  %v215 = vsel %vm214, %v207, %v211
  %v216 = vand.u32 2147483647, %v205
  %vm217 = vcmp.eq.f32.partialorder %v216, 8.507059e+37
  %v218 = vand.u32 %v205, 2147483648
  %v219 = vor.u32 1.1754944e-38, %v218
  %v220 = vsel %vm217, %v219, %v215
  %v221 = vmul.f32 1.0, %v220
  %v222 = vrcp.pop %v206
  %v223 = vmul.f32 %v206, %v222
  %v224 = vsub.f32 1.0, %v223
  %v225 = vmul.f32 %v222, %v224
  %v226 = vadd.f32 %v222, %v225
  %vm227 = vweird.f32 %v206
  %vm228 = vweird.f32 %v222
  %vm229 = vmor %vm227, %vm228
  %v230 = vsel %vm229, %v222, %v226
  %v231 = vand.u32 2147483647, %v206
  %vm232 = vcmp.eq.f32.partialorder %v231, 8.507059e+37
  %v233 = vand.u32 %v206, 2147483648
  %v234 = vor.u32 1.1754944e-38, %v233
  %v235 = vsel %vm232, %v234, %v230
  %v236 = vmul.f32 1.0, %v235
  %vm237 = vcmask 7168
  %238 = vst.msk [vmem:[%s9] sm:$0xff] %vm237, %v221
  %239 = vst.msk [vmem:[%s9 + $0x8] sm:$0xff] %vm237, %v236
  // Predicated region
  $region38: #{tpu_custom_call.1} parent=0 // pred_check
    _
  $region39: #{tpu_custom_call.1} parent=0 // pred_check_branch
    %241 = sbr.rel (0) target = $region41
  $region40: #{tpu_custom_call.1} parent=0 // pred_region
    _
  $region41: #{tpu_custom_call.1} parent=0 // pred_fallthru
    _
  // Predicated region
  $region42: #{tpu_custom_call.1} parent=0 // pred_check
    _
  $region43: #{tpu_custom_call.1} parent=0 // pred_check_branch
    %243 = sbr.rel (0) target = $region45
  $region44: #{tpu_custom_call.1} parent=0 // pred_region
    _
  $region45: #{tpu_custom_call.1} parent=0 // pred_fallthru
    _

</llo_original>
